<compile_context>
chip_gen: v7x
topology: tpu7x:2x2x1
jax: 0.10.0
libtpu: 0.0.40
codegen_flags: <defaults>
</compile_context>

<pallas_src>
import jax
import jax.numpy as jnp
from jax.experimental import pallas as pl
from jax.experimental.pallas import tpu as pltpu


def autoencoder_kernel(x_ref, wg_ref, bg_ref, wh_ref, bh_ref, out_ref):
    # x_ref:  [TB, Q] f32    wg_ref: [Q, Kp] bf16   bg_ref: [1, Kp] f32
    # wh_ref: [Kp, Q] bf16   bh_ref: [1, Q]  f32    out_ref: [TB, Q] f32
    x = x_ref[...].astype(jnp.bfloat16)

    # Encoder: sigmoid(x @ Wg^T + bg); bf16 MXU matmul, f32 accumulate.
    z1 = jnp.dot(x, wg_ref[...], preferred_element_type=jnp.float32) + bg_ref[...]
    enc = pl.reciprocal(1.0 + jnp.exp(-z1), approx=True)          # EUP exp + recip

    # Decoder: sigmoid(enc @ Wh^T + bh)
    z2 = jnp.dot(enc.astype(jnp.bfloat16), wh_ref[...],
                 preferred_element_type=jnp.float32) + bh_ref[...]
    dec = pl.reciprocal(1.0 + jnp.exp(-z2), approx=True)

    out_ref[...] = dec.astype(out_ref.dtype)


def prepare_autoencoder_params(wg, bg, wh, bh, lane=128):
    """One-time parameter prep (hoisted out of the per-call path).

    wg: [K, Q] (PyTorch g.weight)   bg: [K]
    wh: [Q, K] (PyTorch h.weight)   bh: [Q]

    The hidden dim K is zero-padded up to a multiple of 128 (Kp).  Padded
    encoder outputs are sigmoid(0)=0.5 but are multiplied by zero rows of
    Wh^T, so the decoder output is unchanged.

    Returns (wg_t[Q,Kp] bf16, bg[1,Kp] f32, wh_t[Kp,Q] bf16, bh[1,Q] f32).
    """
    K, Q = wg.shape
    Kp = ((K + lane - 1) // lane) * lane
    wg_t = jnp.zeros((Q, Kp), jnp.bfloat16).at[:, :K].set(wg.T.astype(jnp.bfloat16))
    bg2 = jnp.zeros((1, Kp), jnp.float32).at[:, :K].set(bg.astype(jnp.float32))
    wh_t = jnp.zeros((Kp, Q), jnp.bfloat16).at[:K, :].set(wh.T.astype(jnp.bfloat16))
    bh2 = bh.reshape(1, Q).astype(jnp.float32)
    return wg_t, bg2, wh_t, bh2


def _pick_batch_tile(B, max_tile=512):
    """Largest batch tile <= max_tile that evenly divides B (keeps blocks exact)."""
    if B <= max_tile:
        return B
    for tb in (max_tile, 256, 128, 64, 32, 16, 8):
        if B % tb == 0:
            return tb
    return B  # fallback: single block


def autoencoder_forward(x, wg_t, bg2, wh_t, bh2):
    """Pallas forward.

    x:    [B, Q] float32
    wg_t: [Q, Kp] bf16   bg2: [1, Kp] f32
    wh_t: [Kp, Q] bf16   bh2: [1, Q]  f32
    Returns decoded: [B, Q] float32.
    """
    B, Q = x.shape
    Kp = wg_t.shape[1]

    TB = _pick_batch_tile(B)
    nb = pl.cdiv(B, TB)

    cost = pl.CostEstimate(
        flops=4 * B * Q * Kp,                # two [B,Q]x[Q,Kp]-sized matmuls
        transcendentals=B * (Kp + Q),        # exp per activation element
        bytes_accessed=(B * Q * 4                      # x (f32)
                        + 2 * Q * Kp * 2               # both weights (bf16)
                        + (Kp + Q) * 4                 # biases (f32)
                        + B * Q * 4),                  # output (f32)
    )

    return pl.pallas_call(
        autoencoder_kernel,
        out_shape=jax.ShapeDtypeStruct((B, Q), jnp.float32),
        grid=(nb,),
        in_specs=[
            pl.BlockSpec((TB, Q), lambda i: (i, 0)),    # x: tiled over batch
            pl.BlockSpec((Q, Kp), lambda i: (0, 0)),    # Wg^T: VMEM-resident
            pl.BlockSpec((1, Kp), lambda i: (0, 0)),    # bg: resident
            pl.BlockSpec((Kp, Q), lambda i: (0, 0)),    # Wh^T: resident
            pl.BlockSpec((1, Q), lambda i: (0, 0)),     # bh: resident
        ],
        out_specs=pl.BlockSpec((TB, Q), lambda i: (i, 0)),
        compiler_params=pltpu.CompilerParams(
            dimension_semantics=("parallel",),          # shard batch over TCs (v7x)
        ),
        cost_estimate=cost,
    )(x, wg_t, bg2, wh_t, bh2)


def autoencoder_ref(x, wg, bg, wh, bh):
    """Pure-JAX f32 reference mirroring the PyTorch forward."""
    enc = jax.nn.sigmoid(x @ wg.T + bg)
    dec = jax.nn.sigmoid(enc @ wh.T + bh)
    return dec


if __name__ == "__main__":
    # Small shapes consistent with the module: num_question=256, default k=100, batch=8.
    B, Q, K = 8, 256, 100

    key = jax.random.PRNGKey(0)
    kx, kwg, kbg, kwh, kbh = jax.random.split(key, 5)

    x = jax.random.normal(kx, (B, Q), dtype=jnp.float32)

    # nn.Linear-style uniform(-1/sqrt(fan_in), 1/sqrt(fan_in)) init.
    lim_g = 1.0 / jnp.sqrt(jnp.float32(Q))
    wg = jax.random.uniform(kwg, (K, Q), jnp.float32, -lim_g, lim_g)  # g.weight
    bg = jax.random.uniform(kbg, (K,), jnp.float32, -lim_g, lim_g)    # g.bias

    lim_h = 1.0 / jnp.sqrt(jnp.float32(K))
    wh = jax.random.uniform(kwh, (Q, K), jnp.float32, -lim_h, lim_h)  # h.weight
    bh = jax.random.uniform(kbh, (Q,), jnp.float32, -lim_h, lim_h)    # h.bias

    # One-time param prep (transposes / padding / bf16 cast hoisted out of the call path).
    wg_t, bg2, wh_t, bh2 = prepare_autoencoder_params(wg, bg, wh, bh)
    wg_t, bg2, wh_t, bh2 = jax.block_until_ready((wg_t, bg2, wh_t, bh2))

    out = autoencoder_forward(x, wg_t, bg2, wh_t, bh2)
    out = jax.block_until_ready(out)

    ref = autoencoder_ref(x, wg, bg, wh, bh)
    assert out.shape == (B, Q)
    # bf16 matmuls + approx reciprocal vs. full-f32 reference: sigmoid outputs
    # live in (0, 1), so atol is the meaningful bound.
    assert jnp.allclose(out, ref, atol=2e-2, rtol=2e-2), "mismatch vs reference"

    print("KERNEL_OK")
</pallas_src>

<mosaic_0001>
module attributes {stable_mosaic.version = 11 : i64} {
  func.func @autoencoder_kernel(%arg0: i32, %arg1: memref<8x256xf32, #tpu.memory_space<vmem>>, %arg2: memref<256x128xbf16, #tpu.memory_space<vmem>>, %arg3: memref<1x128xf32, #tpu.memory_space<vmem>>, %arg4: memref<128x256xbf16, #tpu.memory_space<vmem>>, %arg5: memref<1x256xf32, #tpu.memory_space<vmem>>, %arg6: memref<8x256xf32, #tpu.memory_space<vmem>>) attributes {dimension_semantics = [#tpu.dimension_semantics<parallel>], iteration_bounds = array<i64: 1>, scalar_prefetch = 0 : i64, scratch_operands = 0 : i64, tpu.core_type = #tpu.core_type<tc>, window_params = [{transform_indices = @transform_0, window_bounds = array<i64: 8, 256>}, {pipeline_mode = #tpu.pipeline_mode<synchronous>, transform_indices = @transform_1, window_bounds = array<i64: 256, 128>}, {pipeline_mode = #tpu.pipeline_mode<synchronous>, transform_indices = @transform_2, window_bounds = array<i64: 1, 128>}, {pipeline_mode = #tpu.pipeline_mode<synchronous>, transform_indices = @transform_3, window_bounds = array<i64: 128, 256>}, {pipeline_mode = #tpu.pipeline_mode<synchronous>, transform_indices = @transform_4, window_bounds = array<i64: 1, 256>}, {transform_indices = @transform_5, window_bounds = array<i64: 8, 256>}]} {
    %c0 = arith.constant 0 : index
    %c0_0 = arith.constant 0 : index
    %0 = vector.load %arg1[%c0, %c0_0] : memref<8x256xf32, #tpu.memory_space<vmem>>, vector<8x256xf32>
    %1 = arith.truncf %0 : vector<8x256xf32> to vector<8x256xbf16>
    %c0_1 = arith.constant 0 : index
    %c0_2 = arith.constant 0 : index
    %2 = vector.load %arg2[%c0_1, %c0_2] : memref<256x128xbf16, #tpu.memory_space<vmem>>, vector<256x128xbf16>
    %cst = arith.constant dense<0.000000e+00> : vector<8x128xf32>
    %3 = tpu.matmul %1, %2, %cst {dimension_numbers = #tpu.dot_dimension_numbers<[1], [0], [0], [1], [0, 0, 1, 1], [], []>} : vector<8x256xbf16>, vector<256x128xbf16>, vector<8x128xf32> -> vector<8x128xf32>
    %c0_3 = arith.constant 0 : index
    %c0_4 = arith.constant 0 : index
    %4 = vector.load %arg3[%c0_3, %c0_4] : memref<1x128xf32, #tpu.memory_space<vmem>>, vector<1x128xf32>
    %5 = vector.broadcast %4 : vector<1x128xf32> to vector<8x128xf32>
    %6 = arith.addf %3, %5 : vector<8x128xf32>
    %cst_5 = arith.constant 0.000000e+00 : f32
    %7 = vector.broadcast %cst_5 : f32 to vector<8x128xf32>
    %8 = arith.subf %7, %6 : vector<8x128xf32>
    %9 = math.exp %8 : vector<8x128xf32>
    %cst_6 = arith.constant 1.000000e+00 : f32
    %10 = vector.broadcast %cst_6 : f32 to vector<8x128xf32>
    %11 = arith.addf %10, %9 : vector<8x128xf32>
    %12 = tpu.reciprocal %11 {approx = true} : vector<8x128xf32> -> vector<8x128xf32>
    %13 = arith.truncf %12 : vector<8x128xf32> to vector<8x128xbf16>
    %c0_7 = arith.constant 0 : index
    %c0_8 = arith.constant 0 : index
    %14 = vector.load %arg4[%c0_7, %c0_8] : memref<128x256xbf16, #tpu.memory_space<vmem>>, vector<128x256xbf16>
    %cst_9 = arith.constant dense<0.000000e+00> : vector<8x256xf32>
    %15 = tpu.matmul %13, %14, %cst_9 {dimension_numbers = #tpu.dot_dimension_numbers<[1], [0], [0], [1], [0, 0, 1, 1], [], []>} : vector<8x128xbf16>, vector<128x256xbf16>, vector<8x256xf32> -> vector<8x256xf32>
    %c0_10 = arith.constant 0 : index
    %c0_11 = arith.constant 0 : index
    %16 = vector.load %arg5[%c0_10, %c0_11] : memref<1x256xf32, #tpu.memory_space<vmem>>, vector<1x256xf32>
    %17 = vector.broadcast %16 : vector<1x256xf32> to vector<8x256xf32>
    %18 = arith.addf %15, %17 : vector<8x256xf32>
    %cst_12 = arith.constant 0.000000e+00 : f32
    %19 = vector.broadcast %cst_12 : f32 to vector<8x256xf32>
    %20 = arith.subf %19, %18 : vector<8x256xf32>
    %21 = math.exp %20 : vector<8x256xf32>
    %cst_13 = arith.constant 1.000000e+00 : f32
    %22 = vector.broadcast %cst_13 : f32 to vector<8x256xf32>
    %23 = arith.addf %22, %21 : vector<8x256xf32>
    %24 = tpu.reciprocal %23 {approx = true} : vector<8x256xf32> -> vector<8x256xf32>
    %c0_14 = arith.constant 0 : index
    %c0_15 = arith.constant 0 : index
    %25 = vector.load %arg6[%c0_14, %c0_15] : memref<8x256xf32, #tpu.memory_space<vmem>>, vector<8x256xf32>
    tpu.vector_store %arg6[%c0_14, %c0_15], %24 {strides = array<i32>} : memref<8x256xf32, #tpu.memory_space<vmem>>, vector<8x256xf32>,
    return
  }
  func.func @transform_0(%arg0: i32) -> (i32, i32) {
    %c0_i32 = arith.constant 0 : i32
    %c0_i32_0 = arith.constant 0 : i32
    return %arg0, %c0_i32 : i32, i32
  }
  func.func @transform_1(%arg0: i32) -> (i32, i32) {
    %c0_i32 = arith.constant 0 : i32
    %c0_i32_0 = arith.constant 0 : i32
    %c0_i32_1 = arith.constant 0 : i32
    return %c0_i32, %c0_i32_0 : i32, i32
  }
  func.func @transform_2(%arg0: i32) -> (i32, i32) {
    %c0_i32 = arith.constant 0 : i32
    %c0_i32_0 = arith.constant 0 : i32
    %c0_i32_1 = arith.constant 0 : i32
    return %c0_i32, %c0_i32_0 : i32, i32
  }
  func.func @transform_3(%arg0: i32) -> (i32, i32) {
    %c0_i32 = arith.constant 0 : i32
    %c0_i32_0 = arith.constant 0 : i32
    %c0_i32_1 = arith.constant 0 : i32
    return %c0_i32, %c0_i32_0 : i32, i32
  }
  func.func @transform_4(%arg0: i32) -> (i32, i32) {
    %c0_i32 = arith.constant 0 : i32
    %c0_i32_0 = arith.constant 0 : i32
    %c0_i32_1 = arith.constant 0 : i32
    return %c0_i32, %c0_i32_0 : i32, i32
  }
  func.func @transform_5(%arg0: i32) -> (i32, i32) {
    %c0_i32 = arith.constant 0 : i32
    %c0_i32_0 = arith.constant 0 : i32
    return %arg0, %c0_i32 : i32, i32
  }
}

</mosaic_0001>

<llo_original>
// kernel: tpu_custom_call.1
$region0: #{tpu_custom_call.1}
  #allocation0 [shape = 'u32[]', space=smem, size = 0x4, offset = 0x4, fixed_abs, tag = 'smem constant byte address 0x4 - core index']
  #allocation1 [shape = 'u32[144,128]{1,0:T(1,128)}', space=vmem, size = 0x12000, scoped, tag = 'internal scratch']
  %s0 = inlined_call_operand.hbm [shape: f32[8,256], index: 0, kind: input, shape index: {}]
  %s1 = inlined_call_operand.hbm [shape: bf16[256,128], index: 1, kind: input, shape index: {}]
  %s2 = inlined_call_operand.vmem [shape: f32[1,128], index: 2, kind: input, shape index: {}]
  %s3 = inlined_call_operand.hbm [shape: bf16[128,256], index: 3, kind: input, shape index: {}]
  %s4 = inlined_call_operand.vmem [shape: f32[1,256], index: 4, kind: input, shape index: {}]
  %s5 = inlined_call_operand.hbm [shape: f32[8,256], index: 5, kind: output, shape index: {}]
  %s6 = sld [smem:[#allocation0]]
  $region42: #{tpu_custom_call.1} parent=0
    _
  %s8 = ssub.s32 1, %s6
  %s9 = scalar_select 0, %s8, %s6
  $region1: #{tpu_custom_call.1} parent=0
    #allocation2 [shape = 'u8[8192]{0}', space=vmem, size = 0x2000, scoped, tag = 'input window, operand 0, single buffered']
    #allocation3 [shape = 's32[1]{0}', space=sflag, size = 0x4, scoped, tag = 'scoped memory for tpu_custom_call.1']
    #allocation4 [shape = 's32[1]{0}', space=sflag, size = 0x4, scoped, tag = 'scoped memory for tpu_custom_call.1']
    #allocation5 [shape = 'u8[65536]{0}', space=vmem, size = 0x10000, scoped, tag = 'input window, operand 1, single buffered']
    #allocation6 [shape = 's32[1]{0}', space=sflag, size = 0x4, scoped, tag = 'scoped memory for tpu_custom_call.1']
    #allocation7 [shape = 'u8[65536]{0}', space=vmem, size = 0x10000, scoped, tag = 'input window, operand 3, single buffered']
    #allocation8 [shape = 'u8[8192]{0}', space=vmem, size = 0x2000, scoped, tag = 'output window, operand 0, single buffered']
    %10 = vsyncpa [#allocation3], 0
    %11 = vsyncpa [#allocation6], 0
    %12 = vsyncpa [#allocation4], 0
    // Predicated region
    $region2: #{tpu_custom_call.1} parent=1 // pred_check
      _
    $region3: #{tpu_custom_call.1} parent=1 // pred_check_branch
      %14 = sbr.rel (0) target = $region5
    $region4: #{tpu_custom_call.1} parent=1 // pred_region
      %s16 = ssub.s32 256, 256
      %17 = vsyncadd [#allocation3], %s16
      %s19 = sshll.u32 [#allocation2], 4
      %s20 = int_to_ptr.vmem [resolvable:$true] %s19
      %22 = dma.hbm_to_vmem [thread:$0]  %s0, 256, %s20, [#allocation3]
    $region5: #{tpu_custom_call.1} parent=1 // pred_fallthru
      _
    // Predicated region
    $region6: #{tpu_custom_call.1} parent=1 // pred_check
      _
    $region7: #{tpu_custom_call.1} parent=1 // pred_check_branch
      %24 = sbr.rel (0) target = $region9
    $region8: #{tpu_custom_call.1} parent=1 // pred_region
      %s26 = ssub.s32 2048, 2048
      %27 = vsyncadd [#allocation6], %s26
      %s28 = sshll.u32 [#allocation5], 4
      %s29 = int_to_ptr.vmem [resolvable:$true] %s28
      %34 = dma.hbm_to_vmem [thread:$0]  %s1, 2048, %s29, [#allocation6], 64, 64, 4
    $region9: #{tpu_custom_call.1} parent=1 // pred_fallthru
      _
    // Predicated region
    $region10: #{tpu_custom_call.1} parent=1 // pred_check
      _
    $region11: #{tpu_custom_call.1} parent=1 // pred_check_branch
      %36 = sbr.rel (0) target = $region13
    $region12: #{tpu_custom_call.1} parent=1 // pred_region
      _
    $region13: #{tpu_custom_call.1} parent=1 // pred_fallthru
      _
    // Predicated region
    $region14: #{tpu_custom_call.1} parent=1 // pred_check
      _
    $region15: #{tpu_custom_call.1} parent=1 // pred_check_branch
      %38 = sbr.rel (0) target = $region17
    $region16: #{tpu_custom_call.1} parent=1 // pred_region
      %s40 = ssub.s32 2048, 2048
      %41 = vsyncadd [#allocation6], %s40
      %s42 = sshll.u32 [#allocation7], 4
      %s43 = int_to_ptr.vmem [resolvable:$true] %s42
      %48 = dma.hbm_to_vmem [thread:$0]  %s3, 2048, %s43, [#allocation6], 128, 128, 8
    $region17: #{tpu_custom_call.1} parent=1 // pred_fallthru
      _
    // Predicated region
    $region18: #{tpu_custom_call.1} parent=1 // pred_check
      _
    $region19: #{tpu_custom_call.1} parent=1 // pred_check_branch
      %50 = sbr.rel (0) target = $region21
    $region20: #{tpu_custom_call.1} parent=1 // pred_region
      _
    $region21: #{tpu_custom_call.1} parent=1 // pred_fallthru
      _
    // Predicated region
    $region22: #{tpu_custom_call.1} parent=1 // pred_check
      _
    $region23: #{tpu_custom_call.1} parent=1 // pred_check_branch
      %52 = sbr.rel (0) target = $region25
    $region24: #{tpu_custom_call.1} parent=1 // pred_region
      %53 = dma.done [#allocation3], 256
    $region25: #{tpu_custom_call.1} parent=1 // pred_fallthru
      _
    // Predicated region
    $region26: #{tpu_custom_call.1} parent=1 // pred_check
      _
    $region27: #{tpu_custom_call.1} parent=1 // pred_check_branch
      %55 = sbr.rel (0) target = $region29
    $region28: #{tpu_custom_call.1} parent=1 // pred_region
      %56 = dma.done [#allocation6], 2048
    $region29: #{tpu_custom_call.1} parent=1 // pred_fallthru
      _
    // Predicated region
    $region30: #{tpu_custom_call.1} parent=1 // pred_check
      _
    $region31: #{tpu_custom_call.1} parent=1 // pred_check_branch
      %58 = sbr.rel (0) target = $region33
    $region32: #{tpu_custom_call.1} parent=1 // pred_region
      %59 = dma.done [#allocation6], 2048
    $region33: #{tpu_custom_call.1} parent=1 // pred_fallthru
      _
    %v61 = vld [vmem:[#allocation2] sm:$0xff]
    %v62 = vld [vmem:[#allocation2 + $0x8] sm:$0xff]
    %v63 = vpack.c.bf16 %v61, %v61
    %v64 = vpack.c.bf16 %v62, %v62
    %v65 = vld [vmem:[#allocation5] sm:$0xf]
    %v66 = vld [vmem:[#allocation5 + $0x4] sm:$0xf]
    %v67 = vld [vmem:[#allocation5 + $0x8] sm:$0xf]
    %v68 = vld [vmem:[#allocation5 + $0xc] sm:$0xf]
    %v69 = vld [vmem:[#allocation5 + $0x10] sm:$0xf]
    %v70 = vld [vmem:[#allocation5 + $0x14] sm:$0xf]
    %v71 = vld [vmem:[#allocation5 + $0x18] sm:$0xf]
    %v72 = vld [vmem:[#allocation5 + $0x1c] sm:$0xf]
    %v73 = vld [vmem:[#allocation5 + $0x20] sm:$0xf]
    %v74 = vld [vmem:[#allocation5 + $0x24] sm:$0xf]
    %v75 = vld [vmem:[#allocation5 + $0x28] sm:$0xf]
    %v76 = vld [vmem:[#allocation5 + $0x2c] sm:$0xf]
    %v77 = vld [vmem:[#allocation5 + $0x30] sm:$0xf]
    %v78 = vld [vmem:[#allocation5 + $0x34] sm:$0xf]
    %v79 = vld [vmem:[#allocation5 + $0x38] sm:$0xf]
    %v80 = vld [vmem:[#allocation5 + $0x3c] sm:$0xf]
    %v81 = vld [vmem:[#allocation5 + $0x40] sm:$0xf]
    %v82 = vld [vmem:[#allocation5 + $0x44] sm:$0xf]
    %v83 = vld [vmem:[#allocation5 + $0x48] sm:$0xf]
    %v84 = vld [vmem:[#allocation5 + $0x4c] sm:$0xf]
    %v85 = vld [vmem:[#allocation5 + $0x50] sm:$0xf]
    %v86 = vld [vmem:[#allocation5 + $0x54] sm:$0xf]
    %v87 = vld [vmem:[#allocation5 + $0x58] sm:$0xf]
    %v88 = vld [vmem:[#allocation5 + $0x5c] sm:$0xf]
    %v89 = vld [vmem:[#allocation5 + $0x60] sm:$0xf]
    %v90 = vld [vmem:[#allocation5 + $0x64] sm:$0xf]
    %v91 = vld [vmem:[#allocation5 + $0x68] sm:$0xf]
    %v92 = vld [vmem:[#allocation5 + $0x6c] sm:$0xf]
    %v93 = vld [vmem:[#allocation5 + $0x70] sm:$0xf]
    %v94 = vld [vmem:[#allocation5 + $0x74] sm:$0xf]
    %v95 = vld [vmem:[#allocation5 + $0x78] sm:$0xf]
    %v96 = vld [vmem:[#allocation5 + $0x7c] sm:$0xf]
    %v97 = vld [vmem:[%s2] sm:$0x1]
    %v99 = vlaneseq
    %v100 = vshrl.u32 %v99, 7
    %v101 = vsub.s32 0, %v100
    %v102 = vrot.slane %v97, %v101
    %v136 = vunpack.c.l.b16 %v65
    %v137 = vunpack.c.l.b16 %v66
    %v138 = vunpack.c.l.b16 %v67
    %v139 = vunpack.c.l.b16 %v68
    %v140 = vunpack.c.l.b16 %v69
    %v141 = vunpack.c.l.b16 %v70
    %v142 = vunpack.c.l.b16 %v71
    %v143 = vunpack.c.l.b16 %v72
    %v144 = vunpack.c.l.b16 %v73
    %v145 = vunpack.c.l.b16 %v74
    %v146 = vunpack.c.l.b16 %v75
    %v147 = vunpack.c.l.b16 %v76
    %v148 = vunpack.c.l.b16 %v77
    %v149 = vunpack.c.l.b16 %v78
    %v150 = vunpack.c.l.b16 %v79
    %v151 = vunpack.c.l.b16 %v80
    %v152 = vunpack.c.l.b16 %v81
    %v153 = vunpack.c.l.b16 %v82
    %v154 = vunpack.c.l.b16 %v83
    %v155 = vunpack.c.l.b16 %v84
    %v156 = vunpack.c.l.b16 %v85
    %v157 = vunpack.c.l.b16 %v86
    %v158 = vunpack.c.l.b16 %v87
    %v159 = vunpack.c.l.b16 %v88
    %v160 = vunpack.c.l.b16 %v89
    %v161 = vunpack.c.l.b16 %v90
    %v162 = vunpack.c.l.b16 %v91
    %v163 = vunpack.c.l.b16 %v92
    %v164 = vunpack.c.l.b16 %v93
    %v165 = vunpack.c.l.b16 %v94
    %v166 = vunpack.c.l.b16 %v95
    %v167 = vunpack.c.l.b16 %v96
    %v168 = vpack.c.b16 %v137, %v136
    %v169 = vpack.c.b16 %v139, %v138
    %v170 = vpack.c.b16 %v141, %v140
    %v171 = vpack.c.b16 %v143, %v142
    %v172 = vpack.c.b16 %v145, %v144
    %v173 = vpack.c.b16 %v147, %v146
    %v174 = vpack.c.b16 %v149, %v148
    %v175 = vpack.c.b16 %v151, %v150
    %v176 = vpack.c.b16 %v153, %v152
    %v177 = vpack.c.b16 %v155, %v154
    %v178 = vpack.c.b16 %v157, %v156
    %v179 = vpack.c.b16 %v159, %v158
    %v180 = vpack.c.b16 %v161, %v160
    %v181 = vpack.c.b16 %v163, %v162
    %v182 = vpack.c.b16 %v165, %v164
    %v183 = vpack.c.b16 %v167, %v166
    %200 = vmatprep.subr.bf16.mxu0 0
    %201 = vmatpush1.bf16.msra.mxu0 %v168
    %202 = vmatprep.subr.bf16.mxu0 0
    %203 = vmatpush1.bf16.msra.mxu0 %v169
    %204 = vmatprep.subr.bf16.mxu0 0
    %205 = vmatpush1.bf16.msra.mxu0 %v170
    %206 = vmatprep.subr.bf16.mxu0 0
    %207 = vmatpush1.bf16.msra.mxu0 %v171
    %208 = vmatprep.subr.bf16.mxu0 0
    %209 = vmatpush1.bf16.msra.mxu0 %v172
    %210 = vmatprep.subr.bf16.mxu0 0
    %211 = vmatpush1.bf16.msra.mxu0 %v173
    %212 = vmatprep.subr.bf16.mxu0 0
    %213 = vmatpush1.bf16.msra.mxu0 %v174
    %214 = vmatprep.subr.bf16.mxu0 0
    %215 = vmatpush1.bf16.msra.mxu0 %v175
    %216 = vmatprep.subr.bf16.mxu0 0
    %217 = vmatpush1.bf16.msra.mxu0 %v176
    %218 = vmatprep.subr.bf16.mxu0 0
    %219 = vmatpush1.bf16.msra.mxu0 %v177
    %220 = vmatprep.subr.bf16.mxu0 0
    %221 = vmatpush1.bf16.msra.mxu0 %v178
    %222 = vmatprep.subr.bf16.mxu0 0
    %223 = vmatpush1.bf16.msra.mxu0 %v179
    %224 = vmatprep.subr.bf16.mxu0 0
    %225 = vmatpush1.bf16.msra.mxu0 %v180
    %226 = vmatprep.subr.bf16.mxu0 0
    %227 = vmatpush1.bf16.msra.mxu0 %v181
    %228 = vmatprep.subr.bf16.mxu0 0
    %229 = vmatpush1.bf16.msra.mxu0 %v182
    %230 = vmatprep.subr.bf16.mxu0 0
    %231 = vmatpush1.bf16.msra.mxu0 %v183
    %232 = vmatprep.mubr.bf16.mxu0 %v64
    %233 = vmatmul.mubr.bf16.gmra.mrb[0].mxu0 %v63
    %v234 = vpop.f32.mrb[0].mxu0
    %v235 = vadd.f32 %v102, %v234
    %v236 = vpop.f32.mrb[0].mxu0
    %v237 = vpop.f32.mrb[0].mxu0
    %v238 = vpop.f32.mrb[0].mxu0
    %239 = vdwg.mxu0
    %v240 = vsub.f32 0.0, %v235
    %v241 = vmul.f32 %v240, 1.442695
    %v242 = vpow.pop %v241
    %v243 = vadd.f32 %v242, 1.0
    %v244 = vrcp.pop %v243
    %v245 = vpack.c.bf16 %v244, %v244
    %v246 = vld [vmem:[#allocation7] sm:$0xff]
    %v247 = vld [vmem:[#allocation7 + $0x8] sm:$0xff]
    %v248 = vld [vmem:[#allocation7 + $0x10] sm:$0xff]
    %v249 = vld [vmem:[#allocation7 + $0x18] sm:$0xff]
    %v250 = vld [vmem:[#allocation7 + $0x20] sm:$0xff]
    %v251 = vld [vmem:[#allocation7 + $0x28] sm:$0xff]
    %v252 = vld [vmem:[#allocation7 + $0x30] sm:$0xff]
    %v253 = vld [vmem:[#allocation7 + $0x38] sm:$0xff]
    %v254 = vld [vmem:[#allocation7 + $0x40] sm:$0xff]
    %v255 = vld [vmem:[#allocation7 + $0x48] sm:$0xff]
    %v256 = vld [vmem:[#allocation7 + $0x50] sm:$0xff]
    %v257 = vld [vmem:[#allocation7 + $0x58] sm:$0xff]
    %v258 = vld [vmem:[#allocation7 + $0x60] sm:$0xff]
    %v259 = vld [vmem:[#allocation7 + $0x68] sm:$0xff]
    %v260 = vld [vmem:[#allocation7 + $0x70] sm:$0xff]
    %v261 = vld [vmem:[#allocation7 + $0x78] sm:$0xff]
    %v262 = vld [vmem:[%s4] sm:$0x3]
    %v264 = vlaneseq
    %v265 = vshrl.u32 %v264, 7
    %v266 = vsub.s32 0, %v265
    %v267 = vrot.slane %v262, %v266
    %v268 = vlaneseq
    %v269 = vshrl.u32 %v268, 7
    %v270 = vsub.s32 1, %v269
    %v271 = vrot.slane %v262, %v270
    %v290 = vunpack.c.l.b16 %v246
    %v291 = vunpack.c.h.b16 %v246
    %v292 = vunpack.c.l.b16 %v247
    %v293 = vunpack.c.h.b16 %v247
    %v294 = vunpack.c.l.b16 %v248
    %v295 = vunpack.c.h.b16 %v248
    %v296 = vunpack.c.l.b16 %v249
    %v297 = vunpack.c.h.b16 %v249
    %v298 = vunpack.c.l.b16 %v250
    %v299 = vunpack.c.h.b16 %v250
    %v300 = vunpack.c.l.b16 %v251
    %v301 = vunpack.c.h.b16 %v251
    %v302 = vunpack.c.l.b16 %v252
    %v303 = vunpack.c.h.b16 %v252
    %v304 = vunpack.c.l.b16 %v253
    %v305 = vunpack.c.h.b16 %v253
    %v306 = vunpack.c.l.b16 %v254
    %v307 = vunpack.c.h.b16 %v254
    %v308 = vunpack.c.l.b16 %v255
    %v309 = vunpack.c.h.b16 %v255
    %v310 = vunpack.c.l.b16 %v256
    %v311 = vunpack.c.h.b16 %v256
    %v312 = vunpack.c.l.b16 %v257
    %v313 = vunpack.c.h.b16 %v257
    %v314 = vunpack.c.l.b16 %v258
    %v315 = vunpack.c.h.b16 %v258
    %v316 = vunpack.c.l.b16 %v259
    %v317 = vunpack.c.h.b16 %v259
    %v318 = vunpack.c.l.b16 %v260
    %v319 = vunpack.c.h.b16 %v260
    %v320 = vunpack.c.l.b16 %v261
    %v321 = vunpack.c.h.b16 %v261
    %v322 = vpack.c.b16 %v292, %v290
    %v323 = vpack.c.b16 %v293, %v291
    %v324 = vpack.c.b16 %v296, %v294
    %v325 = vpack.c.b16 %v297, %v295
    %v326 = vpack.c.b16 %v300, %v298
    %v327 = vpack.c.b16 %v301, %v299
    %v328 = vpack.c.b16 %v304, %v302
    %v329 = vpack.c.b16 %v305, %v303
    %v330 = vpack.c.b16 %v308, %v306
    %v331 = vpack.c.b16 %v309, %v307
    %v332 = vpack.c.b16 %v312, %v310
    %v333 = vpack.c.b16 %v313, %v311
    %v334 = vpack.c.b16 %v316, %v314
    %v335 = vpack.c.b16 %v317, %v315
    %v336 = vpack.c.b16 %v320, %v318
    %v337 = vpack.c.b16 %v321, %v319
    %354 = vmatprep.subr.bf16.mxu0 %v323
    %355 = vmatpush1.bf16.msra.mxu0 %v322
    %356 = vmatprep.subr.bf16.mxu0 %v325
    %357 = vmatpush1.bf16.msra.mxu0 %v324
    %358 = vmatprep.subr.bf16.mxu0 %v327
    %359 = vmatpush1.bf16.msra.mxu0 %v326
    %360 = vmatprep.subr.bf16.mxu0 %v329
    %361 = vmatpush1.bf16.msra.mxu0 %v328
    %362 = vmatprep.subr.bf16.mxu0 %v331
    %363 = vmatpush1.bf16.msra.mxu0 %v330
    %364 = vmatprep.subr.bf16.mxu0 %v333
    %365 = vmatpush1.bf16.msra.mxu0 %v332
    %366 = vmatprep.subr.bf16.mxu0 %v335
    %367 = vmatpush1.bf16.msra.mxu0 %v334
    %368 = vmatprep.subr.bf16.mxu0 %v337
    %369 = vmatpush1.bf16.msra.mxu0 %v336
    %370 = vmatprep.subr.bf16.mxu0 0
    %371 = vmatpush1.bf16.msra.mxu0 0
    %372 = vmatprep.subr.bf16.mxu0 0
    %373 = vmatpush1.bf16.msra.mxu0 0
    %374 = vmatprep.subr.bf16.mxu0 0
    %375 = vmatpush1.bf16.msra.mxu0 0
    %376 = vmatprep.subr.bf16.mxu0 0
    %377 = vmatpush1.bf16.msra.mxu0 0
    %378 = vmatprep.subr.bf16.mxu0 0
    %379 = vmatpush1.bf16.msra.mxu0 0
    %380 = vmatprep.subr.bf16.mxu0 0
    %381 = vmatpush1.bf16.msra.mxu0 0
    %382 = vmatprep.subr.bf16.mxu0 0
    %383 = vmatpush1.bf16.msra.mxu0 0
    %384 = vmatprep.subr.bf16.mxu0 0
    %385 = vmatpush1.bf16.msra.mxu0 0
    %386 = vmatprep.mubr.bf16.mxu0 0
    %387 = vmatmul.mubr.bf16.gmra.mrb[0].mxu0 %v245
    %v388 = vpop.f32.mrb[0].mxu0
    %v389 = vadd.f32 %v267, %v388
    %v390 = vpop.f32.mrb[0].mxu0
    %v391 = vadd.f32 %v271, %v390
    %v392 = vpop.f32.mrb[0].mxu0
    %v393 = vpop.f32.mrb[0].mxu0
    %394 = vdwg.mxu0
    %v395 = vsub.f32 0.0, %v389
    %v396 = vsub.f32 0.0, %v391
    %v397 = vmul.f32 %v395, 1.442695
    %v398 = vpow.pop %v397
    %v399 = vmul.f32 %v396, 1.442695
    %v400 = vpow.pop %v399
    %v401 = vadd.f32 %v398, 1.0
    %v402 = vadd.f32 %v400, 1.0
    %v403 = vrcp.pop %v401
    %v404 = vrcp.pop %v402
    %405 = vst [vmem:[#allocation8] sm:$0xff] %v403
    %406 = vst [vmem:[#allocation8 + $0x8] sm:$0xff] %v404
    // Predicated region
    $region34: #{tpu_custom_call.1} parent=1 // pred_check
      _
    $region35: #{tpu_custom_call.1} parent=1 // pred_check_branch
      %408 = sbr.rel (0) target = $region37
    $region36: #{tpu_custom_call.1} parent=1 // pred_region
      %s410 = ssub.s32 256, 256
      %411 = vsyncadd [#allocation4], %s410
      %s413 = sshll.u32 [#allocation8], 4
      %s414 = int_to_ptr.vmem [resolvable:$true] %s413
      %416 = dma.vmem_to_hbm [thread:$0]  %s414, 256, %s5, [#allocation4]
    $region37: #{tpu_custom_call.1} parent=1 // pred_fallthru
      _
    // Predicated region
    $region38: #{tpu_custom_call.1} parent=1 // pred_check
      _
    $region39: #{tpu_custom_call.1} parent=1 // pred_check_branch
      %418 = sbr.rel (0) target = $region41
    $region40: #{tpu_custom_call.1} parent=1 // pred_region
      %419 = dma.done [#allocation4], 256
    $region41: #{tpu_custom_call.1} parent=1 // pred_fallthru
      _
    %420 = vsyncpa [#allocation3], 1
    %421 = vsyncpa [#allocation6], 1
    %422 = vsyncpa [#allocation4], 1

</llo_original>
